<compile_context>
chip_gen: v7x
topology: tpu7x:2x2x1
jax: 0.10.0
libtpu: 0.0.40
codegen_flags: <defaults>
</compile_context>

<pallas_src>
import math

import jax
import jax.numpy as jnp
from jax.experimental import pallas as pl
from jax.experimental.pallas import tpu as pltpu


def _round_up(x: int, m: int) -> int:
    return ((x + m - 1) // m) * m


def angle_embedder_kernel(x_ref, w1_ref, w2_ref, bias_ref, o_ref):
    x = x_ref[...]                      # (TM, Kp)  bf16
    w1 = w1_ref[...]                    # (Kp, Np)  bf16
    w2 = w2_ref[...]                    # (Np, Np)  bf16
    bias = bias_ref[...]                # (2,  Np)  f32
    b1 = bias[0:1, :]
    b2 = bias[1:2, :]

    # linear_1 + bias + ReLU (bf16 MXU inputs, f32 accumulation)
    h = jnp.dot(x, w1, preferred_element_type=jnp.float32) + b1
    h = jnp.maximum(h, 0.0)

    # linear_2 + bias
    out = jnp.dot(h.astype(jnp.bfloat16), w2, preferred_element_type=jnp.float32) + b2

    o_ref[...] = out.astype(o_ref.dtype)


def prepare_params(params, c_in: int, c_out: int):
    """One-time parameter prep: transpose, zero-pad channels to multiples of 128,
    cast matmul weights to bf16.  Do this at load time, not per forward call."""
    kp = _round_up(c_in, 128)
    np_ = _round_up(c_out, 128)

    # PyTorch Linear: y = x @ W.T + b, W has shape (out, in) -> store W.T (in, out).
    w1 = jnp.pad(params["w1"].T, ((0, kp - c_in), (0, np_ - c_out))).astype(jnp.bfloat16)
    w2 = jnp.pad(params["w2"].T, ((0, np_ - c_out), (0, np_ - c_out))).astype(jnp.bfloat16)
    bias = jnp.stack([
        jnp.pad(params["b1"], (0, np_ - c_out)),
        jnp.pad(params["b2"], (0, np_ - c_out)),
    ]).astype(jnp.float32)                                      # (2, Np)

    return {"w1": w1, "w2": w2, "bias": bias, "c_in": c_in, "c_out": c_out,
            "kp": kp, "np": np_}


def angle_embedder(x, prepared, *, tm_max: int = 512):
    """x: [*, N_res, c_in] -> [*, N_res, c_out]."""
    *lead, c_in = x.shape
    assert c_in == prepared["c_in"]
    c_out, kp, np_ = prepared["c_out"], prepared["kp"], prepared["np"]

    m = int(math.prod(lead)) if lead else 1
    tm = min(tm_max, _round_up(m, 8))        # row tile, multiple of 8 (sublane)
    mp = _round_up(m, tm)                    # padded row count, multiple of tm

    x2d = x.reshape(m, c_in)
    x2d = jnp.pad(x2d, ((0, mp - m), (0, kp - c_in))).astype(jnp.bfloat16)

    grid = (mp // tm,)
    out = pl.pallas_call(
        angle_embedder_kernel,
        out_shape=jax.ShapeDtypeStruct((mp, np_), x.dtype),
        grid=grid,
        in_specs=[
            pl.BlockSpec((tm, kp), lambda i: (i, 0)),    # x row tile (pipelined)
            pl.BlockSpec((kp, np_), lambda i: (0, 0)),   # w1 (VMEM resident)
            pl.BlockSpec((np_, np_), lambda i: (0, 0)),  # w2 (VMEM resident)
            pl.BlockSpec((2, np_), lambda i: (0, 0)),    # merged biases
        ],
        out_specs=pl.BlockSpec((tm, np_), lambda i: (i, 0)),
        compiler_params=pltpu.CompilerParams(
            dimension_semantics=("parallel",),
            vmem_limit_bytes=32 * 1024 * 1024,
        ),
    )(x2d, prepared["w1"], prepared["w2"], prepared["bias"])

    return out[:m, :c_out].reshape(*lead, c_out)


def make_params(key, c_in, c_out):
    ks = jax.random.split(key, 4)
    b1_bound = 1.0 / (c_in ** 0.5)
    b2_bound = 1.0 / (c_out ** 0.5)
    uni = lambda k, shp, b: jax.random.uniform(k, shp, jnp.float32, -b, b)
    return {
        "w1": uni(ks[0], (c_out, c_in), b1_bound),
        "b1": uni(ks[1], (c_out,), b1_bound),
        "w2": uni(ks[2], (c_out, c_out), b2_bound),
        "b2": uni(ks[3], (c_out,), b2_bound),
    }


def reference(x, params):
    h = jnp.maximum(x @ params["w1"].T + params["b1"], 0.0)
    return h @ params["w2"].T + params["b2"]


if __name__ == "__main__":
    B, N_RES, C_IN, C_OUT = 2, 16, 57, 64   # 57 = template_angle_feat dim (exercises padding)
    key = jax.random.PRNGKey(0)
    k_x, k_p = jax.random.split(key)

    x = jax.random.normal(k_x, (B, N_RES, C_IN), jnp.float32)
    params = make_params(k_p, C_IN, C_OUT)
    prepared = prepare_params(params, C_IN, C_OUT)

    out = angle_embedder(x, prepared)
    out = jax.block_until_ready(out)

    ref = reference(x, params)
    assert out.shape == (B, N_RES, C_OUT)
    # bf16 matmul inputs -> slightly looser tolerance than pure f32.
    assert jnp.allclose(out, ref, atol=2e-2, rtol=2e-2), "mismatch vs reference"
    print("KERNEL_OK")
</pallas_src>

<mosaic_0001>
module attributes {stable_mosaic.version = 11 : i64} {
  func.func @angle_embedder_kernel(%arg0: i32, %arg1: memref<32x128xbf16, #tpu.memory_space<vmem>>, %arg2: memref<128x128xbf16, #tpu.memory_space<vmem>>, %arg3: memref<128x128xbf16, #tpu.memory_space<vmem>>, %arg4: memref<2x128xf32, #tpu.memory_space<vmem>>, %arg5: memref<32x128xf32, #tpu.memory_space<vmem>>) attributes {dimension_semantics = [#tpu.dimension_semantics<parallel>], iteration_bounds = array<i64: 1>, scalar_prefetch = 0 : i64, scratch_operands = 0 : i64, tpu.core_type = #tpu.core_type<tc>, window_params = [{transform_indices = @transform_0, window_bounds = array<i64: 32, 128>}, {pipeline_mode = #tpu.pipeline_mode<synchronous>, transform_indices = @transform_1, window_bounds = array<i64: 128, 128>}, {pipeline_mode = #tpu.pipeline_mode<synchronous>, transform_indices = @transform_2, window_bounds = array<i64: 128, 128>}, {pipeline_mode = #tpu.pipeline_mode<synchronous>, transform_indices = @transform_3, window_bounds = array<i64: 2, 128>}, {transform_indices = @transform_4, window_bounds = array<i64: 32, 128>}]} {
    %c0 = arith.constant 0 : index
    %c0_0 = arith.constant 0 : index
    %0 = vector.load %arg1[%c0, %c0_0] : memref<32x128xbf16, #tpu.memory_space<vmem>>, vector<32x128xbf16>
    %c0_1 = arith.constant 0 : index
    %c0_2 = arith.constant 0 : index
    %1 = vector.load %arg2[%c0_1, %c0_2] : memref<128x128xbf16, #tpu.memory_space<vmem>>, vector<128x128xbf16>
    %c0_3 = arith.constant 0 : index
    %c0_4 = arith.constant 0 : index
    %2 = vector.load %arg3[%c0_3, %c0_4] : memref<128x128xbf16, #tpu.memory_space<vmem>>, vector<128x128xbf16>
    %c0_5 = arith.constant 0 : index
    %c0_6 = arith.constant 0 : index
    %3 = vector.load %arg4[%c0_5, %c0_6] : memref<2x128xf32, #tpu.memory_space<vmem>>, vector<2x128xf32>
    %4 = vector.extract_strided_slice %3 {offsets = [0, 0], sizes = [1, 128], strides = [1, 1]} : vector<2x128xf32> to vector<1x128xf32>
    %5 = vector.extract_strided_slice %3 {offsets = [1, 0], sizes = [1, 128], strides = [1, 1]} : vector<2x128xf32> to vector<1x128xf32>
    %cst = arith.constant dense<0.000000e+00> : vector<32x128xf32>
    %6 = tpu.matmul %0, %1, %cst {dimension_numbers = #tpu.dot_dimension_numbers<[1], [0], [0], [1], [0, 0, 1, 1], [], []>} : vector<32x128xbf16>, vector<128x128xbf16>, vector<32x128xf32> -> vector<32x128xf32>
    %7 = vector.broadcast %4 : vector<1x128xf32> to vector<32x128xf32>
    %8 = arith.addf %6, %7 : vector<32x128xf32>
    %cst_7 = arith.constant 0.000000e+00 : f32
    %9 = vector.broadcast %cst_7 : f32 to vector<32x128xf32>
    %10 = arith.maximumf %8, %9 : vector<32x128xf32>
    %11 = arith.truncf %10 : vector<32x128xf32> to vector<32x128xbf16>
    %cst_8 = arith.constant dense<0.000000e+00> : vector<32x128xf32>
    %12 = tpu.matmul %11, %2, %cst_8 {dimension_numbers = #tpu.dot_dimension_numbers<[1], [0], [0], [1], [0, 0, 1, 1], [], []>} : vector<32x128xbf16>, vector<128x128xbf16>, vector<32x128xf32> -> vector<32x128xf32>
    %13 = vector.broadcast %5 : vector<1x128xf32> to vector<32x128xf32>
    %14 = arith.addf %12, %13 : vector<32x128xf32>
    %c0_9 = arith.constant 0 : index
    %c0_10 = arith.constant 0 : index
    %15 = vector.load %arg5[%c0_9, %c0_10] : memref<32x128xf32, #tpu.memory_space<vmem>>, vector<32x128xf32>
    tpu.vector_store %arg5[%c0_9, %c0_10], %14 {strides = array<i32>} : memref<32x128xf32, #tpu.memory_space<vmem>>, vector<32x128xf32>,
    return
  }
  func.func @transform_0(%arg0: i32) -> (i32, i32) {
    %c0_i32 = arith.constant 0 : i32
    %c0_i32_0 = arith.constant 0 : i32
    return %arg0, %c0_i32 : i32, i32
  }
  func.func @transform_1(%arg0: i32) -> (i32, i32) {
    %c0_i32 = arith.constant 0 : i32
    %c0_i32_0 = arith.constant 0 : i32
    %c0_i32_1 = arith.constant 0 : i32
    return %c0_i32, %c0_i32_0 : i32, i32
  }
  func.func @transform_2(%arg0: i32) -> (i32, i32) {
    %c0_i32 = arith.constant 0 : i32
    %c0_i32_0 = arith.constant 0 : i32
    %c0_i32_1 = arith.constant 0 : i32
    return %c0_i32, %c0_i32_0 : i32, i32
  }
  func.func @transform_3(%arg0: i32) -> (i32, i32) {
    %c0_i32 = arith.constant 0 : i32
    %c0_i32_0 = arith.constant 0 : i32
    %c0_i32_1 = arith.constant 0 : i32
    return %c0_i32, %c0_i32_0 : i32, i32
  }
  func.func @transform_4(%arg0: i32) -> (i32, i32) {
    %c0_i32 = arith.constant 0 : i32
    %c0_i32_0 = arith.constant 0 : i32
    return %arg0, %c0_i32 : i32, i32
  }
}

</mosaic_0001>

<llo_original>
// kernel: tpu_custom_call.1
$region0: #{tpu_custom_call.1}
  #allocation0 [shape = 'u32[]', space=smem, size = 0x4, offset = 0x4, fixed_abs, tag = 'smem constant byte address 0x4 - core index']
  #allocation1 [shape = 'u32[144,128]{1,0:T(1,128)}', space=vmem, size = 0x12000, scoped, tag = 'internal scratch']
  %s0 = inlined_call_operand.hbm [shape: bf16[32,128], index: 0, kind: input, shape index: {}]
  %s1 = inlined_call_operand.hbm [shape: bf16[128,128], index: 1, kind: input, shape index: {}]
  %s2 = inlined_call_operand.hbm [shape: bf16[128,128], index: 2, kind: input, shape index: {}]
  %s3 = inlined_call_operand.vmem [shape: f32[2,128], index: 3, kind: input, shape index: {}]
  %s4 = inlined_call_operand.hbm [shape: f32[32,128], index: 4, kind: output, shape index: {}]
  %s5 = sld [smem:[#allocation0]]
  $region38: #{tpu_custom_call.1} parent=0
    _
  %s7 = ssub.s32 1, %s5
  %s8 = scalar_select 0, %s7, %s5
  $region1: #{tpu_custom_call.1} parent=0
    #allocation2 [shape = 'u8[8192]{0}', space=vmem, size = 0x2000, scoped, tag = 'input window, operand 0, single buffered']
    #allocation3 [shape = 's32[1]{0}', space=sflag, size = 0x4, scoped, tag = 'scoped memory for tpu_custom_call.1']
    #allocation4 [shape = 's32[1]{0}', space=sflag, size = 0x4, scoped, tag = 'scoped memory for tpu_custom_call.1']
    #allocation5 [shape = 'u8[32768]{0}', space=vmem, size = 0x8000, scoped, tag = 'input window, operand 1, single buffered']
    #allocation6 [shape = 's32[1]{0}', space=sflag, size = 0x4, scoped, tag = 'scoped memory for tpu_custom_call.1']
    #allocation7 [shape = 'u8[32768]{0}', space=vmem, size = 0x8000, scoped, tag = 'input window, operand 2, single buffered']
    #allocation8 [shape = 'u8[16384]{0}', space=vmem, size = 0x4000, scoped, tag = 'output window, operand 0, single buffered']
    %9 = vsyncpa [#allocation3], 0
    %10 = vsyncpa [#allocation6], 0
    %11 = vsyncpa [#allocation4], 0
    // Predicated region
    $region2: #{tpu_custom_call.1} parent=1 // pred_check
      _
    $region3: #{tpu_custom_call.1} parent=1 // pred_check_branch
      %13 = sbr.rel (0) target = $region5
    $region4: #{tpu_custom_call.1} parent=1 // pred_region
      %s15 = ssub.s32 256, 256
      %16 = vsyncadd [#allocation3], %s15
      %s17 = sshll.u32 [#allocation2], 4
      %s18 = int_to_ptr.vmem [resolvable:$true] %s17
      %23 = dma.hbm_to_vmem [thread:$0]  %s0, 256, %s18, [#allocation3], 64, 64, 4
    $region5: #{tpu_custom_call.1} parent=1 // pred_fallthru
      _
    // Predicated region
    $region6: #{tpu_custom_call.1} parent=1 // pred_check
      _
    $region7: #{tpu_custom_call.1} parent=1 // pred_check_branch
      %25 = sbr.rel (0) target = $region9
    $region8: #{tpu_custom_call.1} parent=1 // pred_region
      %s27 = ssub.s32 1024, 1024
      %28 = vsyncadd [#allocation6], %s27
      %s29 = sshll.u32 [#allocation5], 4
      %s30 = int_to_ptr.vmem [resolvable:$true] %s29
      %35 = dma.hbm_to_vmem [thread:$0]  %s1, 1024, %s30, [#allocation6], 64, 64, 4
    $region9: #{tpu_custom_call.1} parent=1 // pred_fallthru
      _
    // Predicated region
    $region10: #{tpu_custom_call.1} parent=1 // pred_check
      _
    $region11: #{tpu_custom_call.1} parent=1 // pred_check_branch
      %37 = sbr.rel (0) target = $region13
    $region12: #{tpu_custom_call.1} parent=1 // pred_region
      %s39 = ssub.s32 1024, 1024
      %40 = vsyncadd [#allocation6], %s39
      %s41 = sshll.u32 [#allocation7], 4
      %s42 = int_to_ptr.vmem [resolvable:$true] %s41
      %47 = dma.hbm_to_vmem [thread:$0]  %s2, 1024, %s42, [#allocation6], 64, 64, 4
    $region13: #{tpu_custom_call.1} parent=1 // pred_fallthru
      _
    // Predicated region
    $region14: #{tpu_custom_call.1} parent=1 // pred_check
      _
    $region15: #{tpu_custom_call.1} parent=1 // pred_check_branch
      %49 = sbr.rel (0) target = $region17
    $region16: #{tpu_custom_call.1} parent=1 // pred_region
      _
    $region17: #{tpu_custom_call.1} parent=1 // pred_fallthru
      _
    // Predicated region
    $region18: #{tpu_custom_call.1} parent=1 // pred_check
      _
    $region19: #{tpu_custom_call.1} parent=1 // pred_check_branch
      %51 = sbr.rel (0) target = $region21
    $region20: #{tpu_custom_call.1} parent=1 // pred_region
      %52 = dma.done [#allocation3], 256
    $region21: #{tpu_custom_call.1} parent=1 // pred_fallthru
      _
    // Predicated region
    $region22: #{tpu_custom_call.1} parent=1 // pred_check
      _
    $region23: #{tpu_custom_call.1} parent=1 // pred_check_branch
      %54 = sbr.rel (0) target = $region25
    $region24: #{tpu_custom_call.1} parent=1 // pred_region
      %55 = dma.done [#allocation6], 1024
    $region25: #{tpu_custom_call.1} parent=1 // pred_fallthru
      _
    // Predicated region
    $region26: #{tpu_custom_call.1} parent=1 // pred_check
      _
    $region27: #{tpu_custom_call.1} parent=1 // pred_check_branch
      %57 = sbr.rel (0) target = $region29
    $region28: #{tpu_custom_call.1} parent=1 // pred_region
      %58 = dma.done [#allocation6], 1024
    $region29: #{tpu_custom_call.1} parent=1 // pred_fallthru
      _
    %v60 = vld [vmem:[#allocation2] sm:$0xf]
    %v61 = vld [vmem:[#allocation2 + $0x4] sm:$0xf]
    %v62 = vld [vmem:[#allocation2 + $0x8] sm:$0xf]
    %v63 = vld [vmem:[#allocation2 + $0xc] sm:$0xf]
    %v64 = vld [vmem:[#allocation5] sm:$0xf]
    %v65 = vld [vmem:[#allocation5 + $0x4] sm:$0xf]
    %v66 = vld [vmem:[#allocation5 + $0x8] sm:$0xf]
    %v67 = vld [vmem:[#allocation5 + $0xc] sm:$0xf]
    %v68 = vld [vmem:[#allocation5 + $0x10] sm:$0xf]
    %v69 = vld [vmem:[#allocation5 + $0x14] sm:$0xf]
    %v70 = vld [vmem:[#allocation5 + $0x18] sm:$0xf]
    %v71 = vld [vmem:[#allocation5 + $0x1c] sm:$0xf]
    %v72 = vld [vmem:[#allocation5 + $0x20] sm:$0xf]
    %v73 = vld [vmem:[#allocation5 + $0x24] sm:$0xf]
    %v74 = vld [vmem:[#allocation5 + $0x28] sm:$0xf]
    %v75 = vld [vmem:[#allocation5 + $0x2c] sm:$0xf]
    %v76 = vld [vmem:[#allocation5 + $0x30] sm:$0xf]
    %v77 = vld [vmem:[#allocation5 + $0x34] sm:$0xf]
    %v78 = vld [vmem:[#allocation5 + $0x38] sm:$0xf]
    %v79 = vld [vmem:[#allocation5 + $0x3c] sm:$0xf]
    %v80 = vld [vmem:[#allocation7] sm:$0xf]
    %v81 = vld [vmem:[#allocation7 + $0x4] sm:$0xf]
    %v82 = vld [vmem:[#allocation7 + $0x8] sm:$0xf]
    %v83 = vld [vmem:[#allocation7 + $0xc] sm:$0xf]
    %v84 = vld [vmem:[#allocation7 + $0x10] sm:$0xf]
    %v85 = vld [vmem:[#allocation7 + $0x14] sm:$0xf]
    %v86 = vld [vmem:[#allocation7 + $0x18] sm:$0xf]
    %v87 = vld [vmem:[#allocation7 + $0x1c] sm:$0xf]
    %v88 = vld [vmem:[#allocation7 + $0x20] sm:$0xf]
    %v89 = vld [vmem:[#allocation7 + $0x24] sm:$0xf]
    %v90 = vld [vmem:[#allocation7 + $0x28] sm:$0xf]
    %v91 = vld [vmem:[#allocation7 + $0x2c] sm:$0xf]
    %v92 = vld [vmem:[#allocation7 + $0x30] sm:$0xf]
    %v93 = vld [vmem:[#allocation7 + $0x34] sm:$0xf]
    %v94 = vld [vmem:[#allocation7 + $0x38] sm:$0xf]
    %v95 = vld [vmem:[#allocation7 + $0x3c] sm:$0xf]
    %v96 = vld [vmem:[%s3] sm:$0x3]
    %v97 = vlaneseq
    %v98 = vshrl.u32 %v97, 7
    %v99 = vsub.s32 0, %v98
    %v100 = vrot.slane %v96, %v99
    %v105 = vunpack.c.l.b16 %v60
    %v106 = vunpack.c.l.b16 %v61
    %v107 = vunpack.c.l.b16 %v62
    %v108 = vunpack.c.l.b16 %v63
    %v109 = vpack.c.b16 %v106, %v105
    %v110 = vpack.c.b16 %v108, %v107
    %v129 = vunpack.c.l.b16 %v64
    %v130 = vunpack.c.l.b16 %v65
    %v131 = vunpack.c.l.b16 %v66
    %v132 = vunpack.c.l.b16 %v67
    %v133 = vunpack.c.l.b16 %v68
    %v134 = vunpack.c.l.b16 %v69
    %v135 = vunpack.c.l.b16 %v70
    %v136 = vunpack.c.l.b16 %v71
    %v137 = vunpack.c.l.b16 %v72
    %v138 = vunpack.c.l.b16 %v73
    %v139 = vunpack.c.l.b16 %v74
    %v140 = vunpack.c.l.b16 %v75
    %v141 = vunpack.c.l.b16 %v76
    %v142 = vunpack.c.l.b16 %v77
    %v143 = vunpack.c.l.b16 %v78
    %v144 = vunpack.c.l.b16 %v79
    %v145 = vpack.c.b16 %v130, %v129
    %v146 = vpack.c.b16 %v132, %v131
    %v147 = vpack.c.b16 %v134, %v133
    %v148 = vpack.c.b16 %v136, %v135
    %v149 = vpack.c.b16 %v138, %v137
    %v150 = vpack.c.b16 %v140, %v139
    %v151 = vpack.c.b16 %v142, %v141
    %v152 = vpack.c.b16 %v144, %v143
    %161 = vmatprep.subr.bf16.mxu0 0
    %162 = vmatpush1.bf16.msra.mxu0 %v145
    %163 = vmatprep.subr.bf16.mxu0 0
    %164 = vmatpush1.bf16.msra.mxu0 %v146
    %165 = vmatprep.subr.bf16.mxu0 0
    %166 = vmatpush1.bf16.msra.mxu0 %v147
    %167 = vmatprep.subr.bf16.mxu0 0
    %168 = vmatpush1.bf16.msra.mxu0 %v148
    %169 = vmatprep.subr.bf16.mxu0 0
    %170 = vmatpush1.bf16.msra.mxu0 %v149
    %171 = vmatprep.subr.bf16.mxu0 0
    %172 = vmatpush1.bf16.msra.mxu0 %v150
    %173 = vmatprep.subr.bf16.mxu0 0
    %174 = vmatpush1.bf16.msra.mxu0 %v151
    %175 = vmatprep.subr.bf16.mxu0 0
    %176 = vmatpush1.bf16.msra.mxu0 %v152
    %177 = vmatprep.subr.bf16.mxu0 0
    %178 = vmatpush1.bf16.msra.mxu0 0
    %179 = vmatprep.subr.bf16.mxu0 0
    %180 = vmatpush1.bf16.msra.mxu0 0
    %181 = vmatprep.subr.bf16.mxu0 0
    %182 = vmatpush1.bf16.msra.mxu0 0
    %183 = vmatprep.subr.bf16.mxu0 0
    %184 = vmatpush1.bf16.msra.mxu0 0
    %185 = vmatprep.subr.bf16.mxu0 0
    %186 = vmatpush1.bf16.msra.mxu0 0
    %187 = vmatprep.subr.bf16.mxu0 0
    %188 = vmatpush1.bf16.msra.mxu0 0
    %189 = vmatprep.subr.bf16.mxu0 0
    %190 = vmatpush1.bf16.msra.mxu0 0
    %191 = vmatprep.subr.bf16.mxu0 0
    %192 = vmatpush1.bf16.msra.mxu0 0
    %193 = vmatprep.mubr.bf16.mxu0 0
    %194 = vmatmul.mubr.bf16.gmra.mrb[0].mxu0 %v109
    %v195 = vpop.f32.mrb[0].mxu0
    %v196 = vadd.f32 %v100, %v195
    %v197 = vpop.f32.mrb[0].mxu0
    %v198 = vpop.f32.mrb[0].mxu0
    %v199 = vadd.f32 %v100, %v198
    %v200 = vpop.f32.mrb[0].mxu0
    %201 = vmatprep.mubr.bf16.mxu0 0
    %202 = vmatmul.mubr.bf16.gmra.mrb[0].mxu0 %v110
    %v203 = vpop.f32.mrb[0].mxu0
    %v204 = vadd.f32 %v100, %v203
    %v205 = vpop.f32.mrb[0].mxu0
    %v206 = vpop.f32.mrb[0].mxu0
    %v207 = vadd.f32 %v100, %v206
    %v208 = vpop.f32.mrb[0].mxu0
    %209 = vdwg.mxu0
    %v210 = vmax.f32 %v196, 0.0
    %v211 = vmax.f32 %v199, 0.0
    %v212 = vmax.f32 %v204, 0.0
    %v213 = vmax.f32 %v207, 0.0
    %v214 = vpack.c.bf16 %v211, %v210
    %v215 = vpack.c.bf16 %v213, %v212
    %v216 = vlaneseq
    %v217 = vshrl.u32 %v216, 7
    %v218 = vsub.s32 1, %v217
    %v219 = vrot.slane %v96, %v218
    %v236 = vunpack.c.l.b16 %v80
    %v237 = vunpack.c.l.b16 %v81
    %v238 = vunpack.c.l.b16 %v82
    %v239 = vunpack.c.l.b16 %v83
    %v240 = vunpack.c.l.b16 %v84
    %v241 = vunpack.c.l.b16 %v85
    %v242 = vunpack.c.l.b16 %v86
    %v243 = vunpack.c.l.b16 %v87
    %v244 = vunpack.c.l.b16 %v88
    %v245 = vunpack.c.l.b16 %v89
    %v246 = vunpack.c.l.b16 %v90
    %v247 = vunpack.c.l.b16 %v91
    %v248 = vunpack.c.l.b16 %v92
    %v249 = vunpack.c.l.b16 %v93
    %v250 = vunpack.c.l.b16 %v94
    %v251 = vunpack.c.l.b16 %v95
    %v252 = vpack.c.b16 %v237, %v236
    %v253 = vpack.c.b16 %v239, %v238
    %v254 = vpack.c.b16 %v241, %v240
    %v255 = vpack.c.b16 %v243, %v242
    %v256 = vpack.c.b16 %v245, %v244
    %v257 = vpack.c.b16 %v247, %v246
    %v258 = vpack.c.b16 %v249, %v248
    %v259 = vpack.c.b16 %v251, %v250
    %268 = vmatprep.subr.bf16.mxu0 0
    %269 = vmatpush1.bf16.msra.mxu0 %v252
    %270 = vmatprep.subr.bf16.mxu0 0
    %271 = vmatpush1.bf16.msra.mxu0 %v253
    %272 = vmatprep.subr.bf16.mxu0 0
    %273 = vmatpush1.bf16.msra.mxu0 %v254
    %274 = vmatprep.subr.bf16.mxu0 0
    %275 = vmatpush1.bf16.msra.mxu0 %v255
    %276 = vmatprep.subr.bf16.mxu0 0
    %277 = vmatpush1.bf16.msra.mxu0 %v256
    %278 = vmatprep.subr.bf16.mxu0 0
    %279 = vmatpush1.bf16.msra.mxu0 %v257
    %280 = vmatprep.subr.bf16.mxu0 0
    %281 = vmatpush1.bf16.msra.mxu0 %v258
    %282 = vmatprep.subr.bf16.mxu0 0
    %283 = vmatpush1.bf16.msra.mxu0 %v259
    %284 = vmatprep.subr.bf16.mxu0 0
    %285 = vmatpush1.bf16.msra.mxu0 0
    %286 = vmatprep.subr.bf16.mxu0 0
    %287 = vmatpush1.bf16.msra.mxu0 0
    %288 = vmatprep.subr.bf16.mxu0 0
    %289 = vmatpush1.bf16.msra.mxu0 0
    %290 = vmatprep.subr.bf16.mxu0 0
    %291 = vmatpush1.bf16.msra.mxu0 0
    %292 = vmatprep.subr.bf16.mxu0 0
    %293 = vmatpush1.bf16.msra.mxu0 0
    %294 = vmatprep.subr.bf16.mxu0 0
    %295 = vmatpush1.bf16.msra.mxu0 0
    %296 = vmatprep.subr.bf16.mxu0 0
    %297 = vmatpush1.bf16.msra.mxu0 0
    %298 = vmatprep.subr.bf16.mxu0 0
    %299 = vmatpush1.bf16.msra.mxu0 0
    %300 = vmatprep.mubr.bf16.mxu0 0
    %301 = vmatmul.mubr.bf16.gmra.mrb[0].mxu0 %v214
    %v302 = vpop.f32.mrb[0].mxu0
    %v303 = vadd.f32 %v219, %v302
    %v304 = vpop.f32.mrb[0].mxu0
    %v305 = vpop.f32.mrb[0].mxu0
    %v306 = vadd.f32 %v219, %v305
    %v307 = vpop.f32.mrb[0].mxu0
    %308 = vmatprep.mubr.bf16.mxu0 0
    %309 = vmatmul.mubr.bf16.gmra.mrb[0].mxu0 %v215
    %v310 = vpop.f32.mrb[0].mxu0
    %v311 = vadd.f32 %v219, %v310
    %v312 = vpop.f32.mrb[0].mxu0
    %v313 = vpop.f32.mrb[0].mxu0
    %v314 = vadd.f32 %v219, %v313
    %v315 = vpop.f32.mrb[0].mxu0
    %316 = vdwg.mxu0
    %317 = vst [vmem:[#allocation8] sm:$0xff] %v303
    %318 = vst [vmem:[#allocation8 + $0x8] sm:$0xff] %v306
    %319 = vst [vmem:[#allocation8 + $0x10] sm:$0xff] %v311
    %320 = vst [vmem:[#allocation8 + $0x18] sm:$0xff] %v314
    // Predicated region
    $region30: #{tpu_custom_call.1} parent=1 // pred_check
      _
    $region31: #{tpu_custom_call.1} parent=1 // pred_check_branch
      %322 = sbr.rel (0) target = $region33
    $region32: #{tpu_custom_call.1} parent=1 // pred_region
      %s324 = ssub.s32 512, 512
      %325 = vsyncadd [#allocation4], %s324
      %s326 = sshll.u32 [#allocation8], 4
      %s327 = int_to_ptr.vmem [resolvable:$true] %s326
      %332 = dma.vmem_to_hbm [thread:$0]  %s327, 512, %s4, [#allocation4], 128, 128, 8
    $region33: #{tpu_custom_call.1} parent=1 // pred_fallthru
      _
    // Predicated region
    $region34: #{tpu_custom_call.1} parent=1 // pred_check
      _
    $region35: #{tpu_custom_call.1} parent=1 // pred_check_branch
      %334 = sbr.rel (0) target = $region37
    $region36: #{tpu_custom_call.1} parent=1 // pred_region
      %335 = dma.done [#allocation4], 512
    $region37: #{tpu_custom_call.1} parent=1 // pred_fallthru
      _
    %336 = vsyncpa [#allocation3], 1
    %337 = vsyncpa [#allocation6], 1
    %338 = vsyncpa [#allocation4], 1

</llo_original>
